<compile_context>
chip_gen: v5e
topology: v5e:2x2
jax: 0.10.0
libtpu: 0.0.40
codegen_flags: <defaults>
</compile_context>

<pallas_src>
import jax
import jax.numpy as jnp
import numpy as np
from jax.experimental import pallas as pl
from jax.experimental.pallas import tpu as pltpu


# Transposed-conv taps per output parity (py, px): list of (ky, kx, dy, dx), meaning
# out[2a+py, 2b+px] += x[a+dy, b+dx] @ W[:, :, ky, kx]   (zero if a+dy / b+dx OOB).
TAPS = {
    (0, 0): [(1, 1, 0, 0)],
    (0, 1): [(1, 2, 0, 0), (1, 0, 0, 1)],
    (1, 0): [(2, 1, 0, 0), (0, 1, 1, 0)],
    (1, 1): [(2, 2, 0, 0), (2, 0, 0, 1), (0, 2, 1, 0), (0, 0, 1, 1)],
}
SHIFT_IDX = {(0, 0): 0, (0, 1): 1, (1, 0): 2, (1, 1): 3}   # (dy, dx) -> tap group


def _choose_lane_tile(N, H, W, target=2048):
    """Largest whole-image, 128-aligned lane tile <= target (falls back sensibly)."""
    img = H * W
    cands = [k * img for k in range(1, N + 1) if N % k == 0 and (k * img) % 128 == 0]
    if not cands:
        # TODO(synk): sub-image lane tiling (needs cross-tile halo for the +W roll).
        return N * img
    within = [t for t in cands if t <= target]
    return max(within) if within else min(cands)


def _make_kernel(W):
    def kernel(x_ref, mask_ref, w1_ref, b1_ref, wd_ref, b2_ref, w3_ref, b3_ref, o_ref):
        f32 = jnp.float32
        cdt = w1_ref.dtype            # MXU compute dtype (bf16 in production packing)
        Mt = x_ref.shape[-1]          # lane-tile size (whole images)

        ok_dx = mask_ref[0:1, :]      # (1, Mt) f32: column b+1 in bounds
        ok_dy = mask_ref[1:2, :]      # (1, Mt) f32: row    a+1 in bounds

        # ---- conv1x1 + BN1 + ReLU (un-replicated, (Cmp, Mt), f32 accumulation) ----
        h1 = jnp.dot(w1_ref[...], x_ref[...], preferred_element_type=f32)
        h1 = jnp.maximum(h1 + b1_ref[...], 0.0)

        # ---- the 4 tap groups from 3 lane rolls (roll(x, Mt-d)[i] == x[i+d]) ----
        g1 = pltpu.roll(h1, shift=Mt - 1, axis=1) * ok_dx        # x[a,   b+1]
        g2 = pltpu.roll(h1, shift=Mt - W, axis=1) * ok_dy        # x[a+1, b  ]
        g3 = pltpu.roll(g1, shift=Mt - W, axis=1) * ok_dy        # x[a+1, b+1]
        xs = jnp.concatenate([h1, g1, g2, g3], axis=0).astype(cdt)   # (4*Cmp, Mt)

        # ---- ConvTranspose2d (all taps, all 4 parities, one matmul) + BN2 + ReLU ----
        # TODO(synk): split into per-parity matmuls when 4*Cmp exceeds the MXU tile
        #             (128 on v5e, 256 on v6e/v7x) so zero blocks stop costing FLOPs.
        h2 = jnp.dot(wd_ref[...], xs, preferred_element_type=f32)
        h2 = jnp.maximum(h2 + b2_ref[...], 0.0)

        # ---- conv1x1 of the 4 parities as one block-diagonal matmul + BN3 + ReLU ----
        h3 = jnp.dot(w3_ref[...], h2.astype(cdt), preferred_element_type=f32)
        o_ref[...] = jnp.maximum(h3 + b3_ref[...], 0.0).astype(o_ref.dtype)

    return kernel


def decoder_block_parallel_forward(x_stack, packed, *, lane_tile_target=2048,
                                   unpack_to_nchw=True):
    """x_stack: (P, N, Cin, H, W) NCHW-per-branch  ->  (P, N, Cout, 2H, 2W)."""
    P, N, Cin, H, W = x_stack.shape
    d = packed["dims"]
    Cmp, Cout, Coutp = d["Cmp"], d["Cout"], d["Coutp"]
    M = N * H * W
    cdt = packed["w1"].dtype

    tile_M = _choose_lane_tile(N, H, W, target=lane_tile_target)
    MT = M // tile_M

    # channels on sublanes, (batch, spatial) flattened on lanes; bf16 here halves
    # the x DMA bytes (don't rely on an in-kernel astype of an f32 input).
    x_t = x_stack.transpose(0, 2, 1, 3, 4).reshape(P, Cin, M).astype(cdt)

    # Hoisted boundary masks: lane index i = n*H*W + a*W + b, identical for every
    # whole-image tile, so one (2, tile_M) block serves all grid steps.
    lane = np.arange(tile_M)
    ok_dx = ((lane % W) < W - 1).astype(np.float32)
    ok_dy = (((lane // W) % H) < H - 1).astype(np.float32)
    masks = jnp.asarray(np.stack([ok_dx, ok_dy]), jnp.float32)

    flops = int(2 * P * M * (Cmp * Cin + 16 * Cmp * Cmp + 16 * Coutp * Cmp))
    bytes_accessed = int(
        x_t.size * x_t.dtype.itemsize
        + P * 4 * Coutp * M * 4
        + sum(int(np.prod(packed[k].shape)) * packed[k].dtype.itemsize
              for k in ("w1", "b1", "wd", "b2", "w3", "b3")))

    # VMEM budget: double-buffered x/out + resident weights + live intermediates.
    xb = jnp.dtype(cdt).itemsize
    per_tile = (2 * (Cin * tile_M * xb + 4 * Coutp * tile_M * 4 + 2 * tile_M * 4)
                + 2 * (Cmp * Cin + 16 * Cmp * Cmp + 16 * Coutp * Cmp) * xb
                + 8 * Cmp * tile_M * 4 + 4 * Coutp * tile_M * 4)
    vmem_limit = int(min(100 * 2**20, max(32 * 2**20, 2 * per_tile)))

    out = pl.pallas_call(
        _make_kernel(W),
        out_shape=jax.ShapeDtypeStruct((P, 4 * Coutp, M), jnp.float32),
        grid=(P, MT),
        in_specs=[
            pl.BlockSpec((None, Cin, tile_M), lambda p, m: (p, 0, m)),
            pl.BlockSpec((2, tile_M), lambda p, m: (0, 0)),
            # weights/biases: index_map independent of m -> resident across m-steps
            pl.BlockSpec((None, Cmp, Cin), lambda p, m: (p, 0, 0)),
            pl.BlockSpec((None, Cmp, 1), lambda p, m: (p, 0, 0)),
            pl.BlockSpec((None, 4 * Cmp, 4 * Cmp), lambda p, m: (p, 0, 0)),
            pl.BlockSpec((None, 4 * Cmp, 1), lambda p, m: (p, 0, 0)),
            pl.BlockSpec((None, 4 * Coutp, 4 * Cmp), lambda p, m: (p, 0, 0)),
            pl.BlockSpec((None, 4 * Coutp, 1), lambda p, m: (p, 0, 0)),
        ],
        out_specs=pl.BlockSpec((None, 4 * Coutp, tile_M), lambda p, m: (p, 0, m)),
        compiler_params=pltpu.CompilerParams(
            dimension_semantics=("parallel", "parallel"),   # P*MT steps for 2 TCs (v7x)
            vmem_limit_bytes=vmem_limit),
        cost_estimate=pl.CostEstimate(flops=flops, transcendentals=0,
                                      bytes_accessed=bytes_accessed),
    )(x_t, masks, packed["w1"], packed["b1"], packed["wd"], packed["b2"],
      packed["w3"], packed["b3"])

    if not unpack_to_nchw:
        # parity-major layout: rows = (py, px, c_padded), lanes = (n, a, b).
        return out

    # rows = (py, px, c) -> NCHW with y = 2a+py, x = 2b+px (extra HBM pass; skip it
    # via unpack_to_nchw=False if the consumer accepts the parity-major layout).
    out = out.reshape(P, 2, 2, Coutp, N, H, W)[:, :, :, :Cout]
    out = out.transpose(0, 4, 3, 5, 1, 6, 2).reshape(P, N, Cout, 2 * H, 2 * W)
    return out


def pack_params(raw, compute_dtype=jnp.bfloat16):
    """Fold inference-form BN into per-branch weights and pack for the kernel.
    compute_dtype=bf16 is the production path (bf16 MXU, halved HBM traffic); biases
    and all accumulation / elementwise work stay f32 (v5e-safe)."""
    eps = raw["eps"]
    w1 = np.asarray(raw["w1_pt"][:, :, 0, 0], np.float32)      # (Cm, Cin)
    wd = np.asarray(raw["wd_pt"], np.float32)                  # (Cm_in, Cm_out, 3, 3)
    bd = np.asarray(raw["bd"], np.float32)                     # (Cm,)
    w3 = np.asarray(raw["w3_pt"][:, :, 0, 0], np.float32)      # (Cout, Cm)
    Cm, Cin = w1.shape
    Cout = w3.shape[0]
    Cmp = int(np.ceil(Cm / 8)) * 8            # sublane-aligned tap-group blocks
    Coutp = int(np.ceil(Cout / 2)) * 2        # 4*Coutp multiple of 8

    def fold(bn):
        g, be, m, v = (np.asarray(t, np.float32) for t in bn)
        s = g / np.sqrt(v + eps)
        return s, be - m * s                                   # per-branch scale, bias

    s1, c1 = fold(raw["bn1"])
    s2, c2 = fold(raw["bn2"])
    c2 = c2 + bd[None, :] * s2                # fold ConvTranspose bias into BN2 bias
    s3, c3 = fold(raw["bn3"])
    P = s1.shape[0]

    # conv1: BN1 scale folded, UN-replicated, zero-padded to Cmp rows
    w1p = np.zeros((P, Cmp, Cin), np.float32)
    w1p[:, :Cm, :] = s1[:, :, None] * w1[None, :, :]
    b1p = np.zeros((P, Cmp, 1), np.float32)
    b1p[:, :Cm, 0] = c1

    # deconv: (4Cmp x 4Cmp); rows = parity*Cmp + out_ch, cols = tap_group*Cmp + in_ch
    wdp = np.zeros((P, 4 * Cmp, 4 * Cmp), np.float32)
    for (py, px), taps in TAPS.items():
        par = 2 * py + px
        for (ky, kx, dy, dx) in taps:
            t = SHIFT_IDX[(dy, dx)]
            blk = wd[:, :, ky, kx].T                           # (out_ch, in_ch)
            wdp[:, par * Cmp:par * Cmp + Cm, t * Cmp:t * Cmp + Cm] = (
                s2[:, :, None] * blk[None, :, :])
    b2p = np.zeros((P, 4 * Cmp, 1), np.float32)
    for par in range(4):
        b2p[:, par * Cmp:par * Cmp + Cm, 0] = c2

    # conv3: block-diagonal over the 4 parities, BN3 scale folded
    w3f = s3[:, :, None] * w3[None, :, :]                      # (P, Cout, Cm)
    w3p = np.zeros((P, 4 * Coutp, 4 * Cmp), np.float32)
    for par in range(4):
        w3p[:, par * Coutp:par * Coutp + Cout, par * Cmp:par * Cmp + Cm] = w3f
    b3p = np.zeros((P, 4 * Coutp, 1), np.float32)
    for par in range(4):
        b3p[:, par * Coutp:par * Coutp + Cout, 0] = c3

    return dict(
        w1=jnp.asarray(w1p, compute_dtype), b1=jnp.asarray(b1p, jnp.float32),
        wd=jnp.asarray(wdp, compute_dtype), b2=jnp.asarray(b2p, jnp.float32),
        w3=jnp.asarray(w3p, compute_dtype), b3=jnp.asarray(b3p, jnp.float32),
        dims=dict(Cin=Cin, Cm=Cm, Cmp=Cmp, Cout=Cout, Coutp=Coutp),
    )


def init_raw_params(key, in_channels, n_filters, num_parallel):
    Cm = in_channels // 4
    eps = 1e-5
    ks = jax.random.split(key, 7)
    w1_pt = jax.random.normal(ks[0], (Cm, in_channels, 1, 1), jnp.float32) * 0.1
    wd_pt = jax.random.normal(ks[1], (Cm, Cm, 3, 3), jnp.float32) * 0.1   # (in,out,kh,kw)
    bd = jax.random.normal(ks[2], (Cm,), jnp.float32) * 0.1
    w3_pt = jax.random.normal(ks[3], (n_filters, Cm, 1, 1), jnp.float32) * 0.1

    def bn_params(k, c):
        k1, k2, k3, k4 = jax.random.split(k, 4)
        gamma = jax.random.uniform(k1, (num_parallel, c), jnp.float32, 0.5, 1.5)
        beta = jax.random.normal(k2, (num_parallel, c), jnp.float32) * 0.1
        mean = jax.random.normal(k3, (num_parallel, c), jnp.float32) * 0.1
        var = jax.random.uniform(k4, (num_parallel, c), jnp.float32, 0.5, 1.5)
        return gamma, beta, mean, var

    return dict(w1_pt=w1_pt, wd_pt=wd_pt, bd=bd, w3_pt=w3_pt,
                bn1=bn_params(ks[4], Cm), bn2=bn_params(ks[5], Cm),
                bn3=bn_params(ks[6], n_filters), eps=eps)


def ref_forward(x_list, raw):
    """Pure-JAX reference matching the PyTorch forward (inference-mode BN), NCHW."""
    eps = raw["eps"]
    hp = jax.lax.Precision.HIGHEST

    def bn(x, p, i):
        g, b, m, v = (t[i] for t in p)
        return ((x - m[None, :, None, None]) / jnp.sqrt(v[None, :, None, None] + eps)
                * g[None, :, None, None] + b[None, :, None, None])

    w1 = raw["w1_pt"][:, :, 0, 0]   # (Cm, Cin)
    w3 = raw["w3_pt"][:, :, 0, 0]   # (Cout, Cm)
    # ConvTranspose2d(k=3, s=2, p=1, op=1) == dilated conv with spatially-flipped kernel.
    K = jnp.flip(raw["wd_pt"], (2, 3)).transpose(1, 0, 2, 3)   # OIHW

    outs = []
    for i, x in enumerate(x_list):
        h = jnp.einsum("nchw,dc->ndhw", x, w1, precision=hp)
        h = jax.nn.relu(bn(h, raw["bn1"], i))
        h = jax.lax.conv_general_dilated(
            h, K, window_strides=(1, 1), padding=((1, 2), (1, 2)),
            lhs_dilation=(2, 2), rhs_dilation=(1, 1),
            dimension_numbers=("NCHW", "OIHW", "NCHW"), precision=hp)
        h = h + raw["bd"][None, :, None, None]
        h = jax.nn.relu(bn(h, raw["bn2"], i))
        h = jnp.einsum("nchw,dc->ndhw", h, w3, precision=hp)
        h = jax.nn.relu(bn(h, raw["bn3"], i))
        outs.append(h)
    return outs


if __name__ == "__main__":
    # in_channels=16 -> mid channels Cm=4 (padded to 8 in-kernel), n_filters=8.
    P, N, Cin, H, W, n_filters = 2, 2, 16, 16, 16, 8
    key = jax.random.PRNGKey(0)
    kx, kp = jax.random.split(key)

    x_stack = jax.random.normal(kx, (P, N, Cin, H, W), jnp.float32)  # NCHW per branch
    raw = init_raw_params(kp, Cin, n_filters, P)
    ref_list = ref_forward([x_stack[i] for i in range(P)], raw)

    # lane_tile_target=256 forces the multi-tile pipelined path at these tiny shapes
    # (production default is 2048 lanes per tile).

    # 1) f32 packing: tight algorithmic check.
    packed_f32 = pack_params(raw, compute_dtype=jnp.float32)
    out32 = jax.block_until_ready(
        decoder_block_parallel_forward(x_stack, packed_f32, lane_tile_target=256))
    for i in range(P):
        np.testing.assert_allclose(np.asarray(out32[i]), np.asarray(ref_list[i]),
                                   rtol=1e-3, atol=1e-3)

    # 2) bf16 packing (production path: bf16 MXU, f32 accumulation): loose check.
    packed_bf16 = pack_params(raw, compute_dtype=jnp.bfloat16)
    out16 = jax.block_until_ready(
        decoder_block_parallel_forward(x_stack, packed_bf16, lane_tile_target=256))
    for i in range(P):
        np.testing.assert_allclose(np.asarray(out16[i]), np.asarray(ref_list[i]),
                                   rtol=5e-2, atol=5e-2)

    print("KERNEL_OK")
</pallas_src>

<mosaic_0001>
module attributes {stable_mosaic.version = 11 : i64} {
  func.func @kernel(%arg0: i32, %arg1: i32, %arg2: memref<1x16x256xf32, #tpu.memory_space<vmem>>, %arg3: memref<2x256xf32, #tpu.memory_space<vmem>>, %arg4: memref<1x8x16xf32, #tpu.memory_space<vmem>>, %arg5: memref<1x8x1xf32, #tpu.memory_space<vmem>>, %arg6: memref<1x32x32xf32, #tpu.memory_space<vmem>>, %arg7: memref<1x32x1xf32, #tpu.memory_space<vmem>>, %arg8: memref<1x32x32xf32, #tpu.memory_space<vmem>>, %arg9: memref<1x32x1xf32, #tpu.memory_space<vmem>>, %arg10: memref<1x32x256xf32, #tpu.memory_space<vmem>>) attributes {dimension_semantics = [#tpu.dimension_semantics<parallel>, #tpu.dimension_semantics<parallel>], iteration_bounds = array<i64: 2, 2>, scalar_prefetch = 0 : i64, scratch_operands = 0 : i64, tpu.core_type = #tpu.core_type<tc>, window_params = [{transform_indices = @transform_0, window_bounds = array<i64: 1, 16, 256>}, {pipeline_mode = #tpu.pipeline_mode<synchronous>, transform_indices = @transform_1, window_bounds = array<i64: 2, 256>}, {transform_indices = @transform_2, window_bounds = array<i64: 1, 8, 16>}, {transform_indices = @transform_3, window_bounds = array<i64: 1, 8, 1>}, {transform_indices = @transform_4, window_bounds = array<i64: 1, 32, 32>}, {transform_indices = @transform_5, window_bounds = array<i64: 1, 32, 1>}, {transform_indices = @transform_6, window_bounds = array<i64: 1, 32, 32>}, {transform_indices = @transform_7, window_bounds = array<i64: 1, 32, 1>}, {transform_indices = @transform_8, window_bounds = array<i64: 1, 32, 256>}]} {
    %c0 = arith.constant 0 : index
    %c0_0 = arith.constant 0 : index
    %0 = vector.load %arg3[%c0, %c0_0] : memref<2x256xf32, #tpu.memory_space<vmem>>, vector<1x256xf32>
    %c1 = arith.constant 1 : index
    %c0_1 = arith.constant 0 : index
    %1 = vector.load %arg3[%c1, %c0_1] : memref<2x256xf32, #tpu.memory_space<vmem>>, vector<1x256xf32>
    %c0_2 = arith.constant 0 : index
    %c0_3 = arith.constant 0 : index
    %c0_4 = arith.constant 0 : index
    %2 = vector.load %arg4[%c0_2, %c0_3, %c0_4] : memref<1x8x16xf32, #tpu.memory_space<vmem>>, vector<1x8x16xf32>
    %3 = vector.shape_cast %2 : vector<1x8x16xf32> to vector<8x16xf32>
    %c0_5 = arith.constant 0 : index
    %c0_6 = arith.constant 0 : index
    %c0_7 = arith.constant 0 : index
    %4 = vector.load %arg2[%c0_5, %c0_6, %c0_7] : memref<1x16x256xf32, #tpu.memory_space<vmem>>, vector<1x16x256xf32>
    %5 = vector.shape_cast %4 : vector<1x16x256xf32> to vector<16x256xf32>
    %cst = arith.constant dense<0.000000e+00> : vector<8x256xf32>
    %6 = tpu.matmul %3, %5, %cst {dimension_numbers = #tpu.dot_dimension_numbers<[1], [0], [0], [1], [0, 0, 1, 1], [], []>} : vector<8x16xf32>, vector<16x256xf32>, vector<8x256xf32> -> vector<8x256xf32>
    %c0_8 = arith.constant 0 : index
    %c0_9 = arith.constant 0 : index
    %c0_10 = arith.constant 0 : index
    %7 = vector.load %arg5[%c0_8, %c0_9, %c0_10] : memref<1x8x1xf32, #tpu.memory_space<vmem>>, vector<1x8x1xf32>
    %8 = vector.shape_cast %7 : vector<1x8x1xf32> to vector<8x1xf32>
    %9 = vector.broadcast %8 : vector<8x1xf32> to vector<8x256xf32>
    %10 = arith.addf %6, %9 : vector<8x256xf32>
    %cst_11 = arith.constant 0.000000e+00 : f32
    %11 = vector.broadcast %cst_11 : f32 to vector<8x256xf32>
    %12 = arith.maximumf %10, %11 : vector<8x256xf32>
    %c255_i32 = arith.constant 255 : i32
    %13 = tpu.dynamic_rotate %12 by %c255_i32 dim 1 : vector<8x256xf32>, i32 -> vector<8x256xf32>
    %14 = vector.broadcast %0 : vector<1x256xf32> to vector<8x256xf32>
    %15 = arith.mulf %13, %14 : vector<8x256xf32>
    %c240_i32 = arith.constant 240 : i32
    %16 = tpu.dynamic_rotate %12 by %c240_i32 dim 1 : vector<8x256xf32>, i32 -> vector<8x256xf32>
    %17 = vector.broadcast %1 : vector<1x256xf32> to vector<8x256xf32>
    %18 = arith.mulf %16, %17 : vector<8x256xf32>
    %c240_i32_12 = arith.constant 240 : i32
    %19 = tpu.dynamic_rotate %15 by %c240_i32_12 dim 1 : vector<8x256xf32>, i32 -> vector<8x256xf32>
    %20 = vector.broadcast %1 : vector<1x256xf32> to vector<8x256xf32>
    %21 = arith.mulf %19, %20 : vector<8x256xf32>
    %22 = tpu.concatenate %12, %15, %18, %21 in 0 : vector<8x256xf32>, vector<8x256xf32>, vector<8x256xf32>, vector<8x256xf32> -> vector<32x256xf32>
    %c0_13 = arith.constant 0 : index
    %c0_14 = arith.constant 0 : index
    %c0_15 = arith.constant 0 : index
    %23 = vector.load %arg6[%c0_13, %c0_14, %c0_15] : memref<1x32x32xf32, #tpu.memory_space<vmem>>, vector<1x32x32xf32>
    %24 = vector.shape_cast %23 : vector<1x32x32xf32> to vector<32x32xf32>
    %cst_16 = arith.constant dense<0.000000e+00> : vector<32x256xf32>
    %25 = tpu.matmul %24, %22, %cst_16 {dimension_numbers = #tpu.dot_dimension_numbers<[1], [0], [0], [1], [0, 0, 1, 1], [], []>} : vector<32x32xf32>, vector<32x256xf32>, vector<32x256xf32> -> vector<32x256xf32>
    %c0_17 = arith.constant 0 : index
    %c0_18 = arith.constant 0 : index
    %c0_19 = arith.constant 0 : index
    %26 = vector.load %arg7[%c0_17, %c0_18, %c0_19] : memref<1x32x1xf32, #tpu.memory_space<vmem>>, vector<1x32x1xf32>
    %27 = vector.shape_cast %26 : vector<1x32x1xf32> to vector<32x1xf32>
    %28 = vector.broadcast %27 : vector<32x1xf32> to vector<32x256xf32>
    %29 = arith.addf %25, %28 : vector<32x256xf32>
    %cst_20 = arith.constant 0.000000e+00 : f32
    %30 = vector.broadcast %cst_20 : f32 to vector<32x256xf32>
    %31 = arith.maximumf %29, %30 : vector<32x256xf32>
    %c0_21 = arith.constant 0 : index
    %c0_22 = arith.constant 0 : index
    %c0_23 = arith.constant 0 : index
    %32 = vector.load %arg8[%c0_21, %c0_22, %c0_23] : memref<1x32x32xf32, #tpu.memory_space<vmem>>, vector<1x32x32xf32>
    %33 = vector.shape_cast %32 : vector<1x32x32xf32> to vector<32x32xf32>
    %cst_24 = arith.constant dense<0.000000e+00> : vector<32x256xf32>
    %34 = tpu.matmul %33, %31, %cst_24 {dimension_numbers = #tpu.dot_dimension_numbers<[1], [0], [0], [1], [0, 0, 1, 1], [], []>} : vector<32x32xf32>, vector<32x256xf32>, vector<32x256xf32> -> vector<32x256xf32>
    %c0_25 = arith.constant 0 : index
    %c0_26 = arith.constant 0 : index
    %c0_27 = arith.constant 0 : index
    %35 = vector.load %arg9[%c0_25, %c0_26, %c0_27] : memref<1x32x1xf32, #tpu.memory_space<vmem>>, vector<1x32x1xf32>
    %36 = vector.shape_cast %35 : vector<1x32x1xf32> to vector<32x1xf32>
    %37 = vector.broadcast %36 : vector<32x1xf32> to vector<32x256xf32>
    %38 = arith.addf %34, %37 : vector<32x256xf32>
    %cst_28 = arith.constant 0.000000e+00 : f32
    %39 = vector.broadcast %cst_28 : f32 to vector<32x256xf32>
    %40 = arith.maximumf %38, %39 : vector<32x256xf32>
    %c0_29 = arith.constant 0 : index
    %c0_30 = arith.constant 0 : index
    %c0_31 = arith.constant 0 : index
    %41 = vector.load %arg10[%c0_29, %c0_30, %c0_31] : memref<1x32x256xf32, #tpu.memory_space<vmem>>, vector<1x32x256xf32>
    %42 = vector.shape_cast %41 : vector<1x32x256xf32> to vector<32x256xf32>
    %43 = vector.shape_cast %40 : vector<32x256xf32> to vector<1x32x256xf32>
    tpu.vector_store %arg10[%c0_29, %c0_30, %c0_31], %43 {strides = array<i32>} : memref<1x32x256xf32, #tpu.memory_space<vmem>>, vector<1x32x256xf32>,
    return
  }
  func.func @transform_0(%arg0: i32, %arg1: i32) -> (i32, i32, i32) {
    %c0_i32 = arith.constant 0 : i32
    %c0_i32_0 = arith.constant 0 : i32
    return %arg0, %c0_i32, %arg1 : i32, i32, i32
  }
  func.func @transform_1(%arg0: i32, %arg1: i32) -> (i32, i32) {
    %c0_i32 = arith.constant 0 : i32
    %c0_i32_0 = arith.constant 0 : i32
    %c0_i32_1 = arith.constant 0 : i32
    return %c0_i32, %c0_i32_0 : i32, i32
  }
  func.func @transform_2(%arg0: i32, %arg1: i32) -> (i32, i32, i32) {
    %c0_i32 = arith.constant 0 : i32
    %c0_i32_0 = arith.constant 0 : i32
    %c0_i32_1 = arith.constant 0 : i32
    return %arg0, %c0_i32, %c0_i32_0 : i32, i32, i32
  }
  func.func @transform_3(%arg0: i32, %arg1: i32) -> (i32, i32, i32) {
    %c0_i32 = arith.constant 0 : i32
    %c0_i32_0 = arith.constant 0 : i32
    %c0_i32_1 = arith.constant 0 : i32
    return %arg0, %c0_i32, %c0_i32_0 : i32, i32, i32
  }
  func.func @transform_4(%arg0: i32, %arg1: i32) -> (i32, i32, i32) {
    %c0_i32 = arith.constant 0 : i32
    %c0_i32_0 = arith.constant 0 : i32
    %c0_i32_1 = arith.constant 0 : i32
    return %arg0, %c0_i32, %c0_i32_0 : i32, i32, i32
  }
  func.func @transform_5(%arg0: i32, %arg1: i32) -> (i32, i32, i32) {
    %c0_i32 = arith.constant 0 : i32
    %c0_i32_0 = arith.constant 0 : i32
    %c0_i32_1 = arith.constant 0 : i32
    return %arg0, %c0_i32, %c0_i32_0 : i32, i32, i32
  }
  func.func @transform_6(%arg0: i32, %arg1: i32) -> (i32, i32, i32) {
    %c0_i32 = arith.constant 0 : i32
    %c0_i32_0 = arith.constant 0 : i32
    %c0_i32_1 = arith.constant 0 : i32
    return %arg0, %c0_i32, %c0_i32_0 : i32, i32, i32
  }
  func.func @transform_7(%arg0: i32, %arg1: i32) -> (i32, i32, i32) {
    %c0_i32 = arith.constant 0 : i32
    %c0_i32_0 = arith.constant 0 : i32
    %c0_i32_1 = arith.constant 0 : i32
    return %arg0, %c0_i32, %c0_i32_0 : i32, i32, i32
  }
  func.func @transform_8(%arg0: i32, %arg1: i32) -> (i32, i32, i32) {
    %c0_i32 = arith.constant 0 : i32
    %c0_i32_0 = arith.constant 0 : i32
    return %arg0, %c0_i32, %arg1 : i32, i32, i32
  }
}

</mosaic_0001>

<llo_original>
// kernel: tpu_custom_call.1
$region0: #{tpu_custom_call.1}
  #allocation0 [shape = 'u32[]', space=smem, size = 0x4, offset = 0x4, fixed_abs, tag = 'smem constant byte address 0x4 - core index']
  #allocation1 [shape = 'u32[72,128]{1,0:T(1,128)}', space=vmem, size = 0x9000, scoped, tag = 'internal scratch']
  %s0 = inlined_call_operand.vmem [shape: f32[2,16,512], index: 0, kind: input, shape index: {}]
  %s1 = inlined_call_operand.vmem [shape: f32[2,256], index: 1, kind: input, shape index: {}]
  %s2 = inlined_call_operand.vmem [shape: f32[2,8,16], index: 2, kind: input, shape index: {}]
  %s3 = inlined_call_operand.vmem [shape: f32[2,8,1], index: 3, kind: input, shape index: {}]
  %s4 = inlined_call_operand.hbm [shape: f32[2,32,32], index: 4, kind: input, shape index: {}]
  %s5 = inlined_call_operand.vmem [shape: f32[2,32,1], index: 5, kind: input, shape index: {}]
  %s6 = inlined_call_operand.hbm [shape: f32[2,32,32], index: 6, kind: input, shape index: {}]
  %s7 = inlined_call_operand.vmem [shape: f32[2,32,1], index: 7, kind: input, shape index: {}]
  %s8 = inlined_call_operand.hbm [shape: f32[2,32,512], index: 8, kind: output, shape index: {}]
  %s9 = sld [smem:[#allocation0]]
  $region96: #{tpu_custom_call.1} parent=0
    _
  %s11 = ssub.s32 1, %s9
  %s12 = scalar_select 0, %s11, %s9
  $region1: #{tpu_custom_call.1} parent=0
    #allocation2 [shape = 'u8[32768]{0}', space=vmem, size = 0x8000, scoped, tag = 'input window, operand 0']
    #allocation3 [shape = 'u8[32768]{0}', space=vmem, size = 0x8000, scoped, tag = 'input window, operand 4']
    #allocation4 [shape = 's32[2]{0}', space=sflag, size = 0x8, scoped, tag = 'scoped memory for tpu_custom_call.1']
    #allocation5 [shape = 's32[2]{0}', space=sflag, size = 0x8, scoped, tag = 'scoped memory for tpu_custom_call.1']
    #allocation6 [shape = 'u8[32768]{0}', space=vmem, size = 0x8000, scoped, tag = 'input window, operand 6']
    #allocation7 [shape = 's32[2]{0}', space=sflag, size = 0x8, scoped, tag = 'scoped memory for tpu_custom_call.1']
    #allocation8 [shape = 'u8[65536]{0}', space=vmem, size = 0x10000, scoped, tag = 'output window, operand 0']
    %13 = vsyncpa [#allocation4], 0
    %s14 = scalar_lea.sflag [#allocation4], 1
    %15 = vsyncpa %s14, 0
    %16 = vsyncpa [#allocation7], 0
    %s17 = scalar_lea.sflag [#allocation7], 1
    %18 = vsyncpa %s17, 0
    %19 = vsyncpa [#allocation5], 0
    %s20 = scalar_lea.sflag [#allocation5], 1
    %21 = vsyncpa %s20, 0
    loop: start=0, step=1, limit=6
    $region2: #{tpu_custom_call.1} parent=1 // loop_pre_header
      _
    $region3: #{tpu_custom_call.1} parent=1 // loop_header
      %s23 = sphi 0, %s27
      %p24 = scmp.ge.s32.totalorder %s23, 6
      %s30 = sphi 0, %s42
      %s31 = sphi 0, %s38
      %s32 = sphi 0, %s30
      %s33 = sphi 0, %s31
      %s34 = sphi 0, %s32
      %s35 = sphi 0, %s33
      %s47 = sphi 0, %s49
      %s50 = sphi 0, %s47
      %s51 = sphi 0, %s50
      %s67 = sphi 0, %s51
      %s71 = sphi 0, %s71
      %s73 = sphi 0, %s71
      %s74 = sphi 0, %s73
      %s88 = sphi 0, %s74
      %s94 = sphi 0, %s96
      %s97 = sphi 0, %s94
      %s98 = sphi 0, %s97
      %s114 = sphi 0, %s98
      %s120 = sphi 0, %s122
      %s123 = sphi 0, %s120
      %s124 = sphi 0, %s123
      %s140 = sphi 0, %s124
      %s146 = sphi 0, %s148
      %s149 = sphi 0, %s146
      %s150 = sphi 0, %s149
      %s166 = sphi 0, %s150
      %s172 = sphi 0, %s174
      %s175 = sphi 0, %s172
      %s176 = sphi 0, %s175
      %s192 = sphi 0, %s176
      %s198 = sphi 0, %s200
      %s201 = sphi 0, %s198
      %s202 = sphi 0, %s201
      %s218 = sphi 0, %s202
      %s224 = sphi 0, %s226
      %s227 = sphi 0, %s224
      %s228 = sphi 0, %s227
      %s244 = sphi 0, %s228
      %s252 = sphi 0, %s254
      %s255 = sphi 0, %s252
      %s256 = sphi 0, %s255
      %s272 = sphi 0, %s256
    $region4: #{tpu_custom_call.1} parent=1 // loop_header_branch
      %26 = sbr.rel (%p24) target = $region8
    $region5: #{tpu_custom_call.1} parent=1 // loop_body
      %s28 = ssub.s32 %s23, 1
      %s29 = ssub.s32 %s23, 2
      %s36 = sadd.s32 1, %s31
      %p37 = scmp.ge.s32.totalorder %s36, 2
      %s38 = scalar_select %p37, 0, %s36
      %s39 = sadd.s32 1, %s30
      %s40 = scalar_select %p37, %s39, %s30
      %p41 = scmp.ge.s32.totalorder %s40, 2
      %s42 = scalar_select %p41, 0, %s40
      %s43 = ssub.s32 %s30, %s42
      %s44 = ssub.s32 %s31, %s38
      %s45 = sor.u32 %s43, %s44
      %p46 = scmp.eq.s32.totalorder %s45, 0
      %s48 = sadd.s32 %s47, 1
      %s49 = scalar_select %p46, %s47, %s48
      %p52 = pneg %p46
      %p53 = scmp.eq.s32.totalorder %s23, 3
      %p54 = por %p52, %p53
      %p55 = scmp.ne.s32.totalorder %s47, %s50
      %p56 = scmp.eq.s32.totalorder %s23, 0
      %p57 = por %p55, %p56
      %p58 = scmp.ne.s32.totalorder %s47, %s50
      %p59 = scmp.eq.s32.totalorder %s28, 3
      %p60 = por %p58, %p59
      %p61 = scmp.ne.s32.totalorder %s50, %s51
      %p62 = scmp.eq.s32.totalorder %s28, 0
      %p63 = por %p61, %p62
      %p64 = scmp.ne.s32.totalorder %s50, %s51
      %p65 = scmp.eq.s32.totalorder %s29, 3
      %p66 = por %p64, %p65
      %p68 = scmp.ne.s32.totalorder %s51, %s67
      %p69 = scmp.eq.s32.totalorder %s29, 0
      %p70 = por %p68, %p69
      %s72 = sadd.s32 %s71, 1
      %p75 = scmp.eq.s32.totalorder %s23, 3
      %p76 = scmp.ne.s32.totalorder %s71, %s73
      %p77 = scmp.eq.s32.totalorder %s23, 0
      %p78 = por %p76, %p77
      %p79 = scmp.ne.s32.totalorder %s71, %s73
      %p80 = scmp.eq.s32.totalorder %s28, 3
      %p81 = por %p79, %p80
      %p82 = scmp.ne.s32.totalorder %s73, %s74
      %p83 = scmp.eq.s32.totalorder %s28, 0
      %p84 = por %p82, %p83
      %p85 = scmp.ne.s32.totalorder %s73, %s74
      %p86 = scmp.eq.s32.totalorder %s29, 3
      %p87 = por %p85, %p86
      %p89 = scmp.ne.s32.totalorder %s74, %s88
      %p90 = scmp.eq.s32.totalorder %s29, 0
      %p91 = por %p89, %p90
      %s92 = ssub.s32 %s30, %s42
      %p93 = scmp.eq.s32.totalorder %s92, 0
      %s95 = sadd.s32 %s94, 1
      %s96 = scalar_select %p93, %s94, %s95
      %p99 = pneg %p93
      %p100 = scmp.eq.s32.totalorder %s23, 3
      %p101 = por %p99, %p100
      %p102 = scmp.ne.s32.totalorder %s94, %s97
      %p103 = scmp.eq.s32.totalorder %s23, 0
      %p104 = por %p102, %p103
      %p105 = scmp.ne.s32.totalorder %s94, %s97
      %p106 = scmp.eq.s32.totalorder %s28, 3
      %p107 = por %p105, %p106
      %p108 = scmp.ne.s32.totalorder %s97, %s98
      %p109 = scmp.eq.s32.totalorder %s28, 0
      %p110 = por %p108, %p109
      %p111 = scmp.ne.s32.totalorder %s97, %s98
      %p112 = scmp.eq.s32.totalorder %s29, 3
      %p113 = por %p111, %p112
      %p115 = scmp.ne.s32.totalorder %s98, %s114
      %p116 = scmp.eq.s32.totalorder %s29, 0
      %p117 = por %p115, %p116
      %s118 = ssub.s32 %s30, %s42
      %p119 = scmp.eq.s32.totalorder %s118, 0
      %s121 = sadd.s32 %s120, 1
      %s122 = scalar_select %p119, %s120, %s121
      %p125 = pneg %p119
      %p126 = scmp.eq.s32.totalorder %s23, 3
      %p127 = por %p125, %p126
      %p128 = scmp.ne.s32.totalorder %s120, %s123
      %p129 = scmp.eq.s32.totalorder %s23, 0
      %p130 = por %p128, %p129
      %p131 = scmp.ne.s32.totalorder %s120, %s123
      %p132 = scmp.eq.s32.totalorder %s28, 3
      %p133 = por %p131, %p132
      %p134 = scmp.ne.s32.totalorder %s123, %s124
      %p135 = scmp.eq.s32.totalorder %s28, 0
      %p136 = por %p134, %p135
      %p137 = scmp.ne.s32.totalorder %s123, %s124
      %p138 = scmp.eq.s32.totalorder %s29, 3
      %p139 = por %p137, %p138
      %p141 = scmp.ne.s32.totalorder %s124, %s140
      %p142 = scmp.eq.s32.totalorder %s29, 0
      %p143 = por %p141, %p142
      %s144 = ssub.s32 %s30, %s42
      %p145 = scmp.eq.s32.totalorder %s144, 0
      %s147 = sadd.s32 %s146, 1
      %s148 = scalar_select %p145, %s146, %s147
      %p151 = pneg %p145
      %p152 = scmp.eq.s32.totalorder %s23, 3
      %p153 = por %p151, %p152
      %p154 = scmp.ne.s32.totalorder %s146, %s149
      %p155 = scmp.eq.s32.totalorder %s23, 0
      %p156 = por %p154, %p155
      %p157 = scmp.ne.s32.totalorder %s146, %s149
      %p158 = scmp.eq.s32.totalorder %s28, 3
      %p159 = por %p157, %p158
      %p160 = scmp.ne.s32.totalorder %s149, %s150
      %p161 = scmp.eq.s32.totalorder %s28, 0
      %p162 = por %p160, %p161
      %p163 = scmp.ne.s32.totalorder %s149, %s150
      %p164 = scmp.eq.s32.totalorder %s29, 3
      %p165 = por %p163, %p164
      %p167 = scmp.ne.s32.totalorder %s150, %s166
      %p168 = scmp.eq.s32.totalorder %s29, 0
      %p169 = por %p167, %p168
      %s170 = ssub.s32 %s30, %s42
      %p171 = scmp.eq.s32.totalorder %s170, 0
      %s173 = sadd.s32 %s172, 1
      %s174 = scalar_select %p171, %s172, %s173
      %p177 = pneg %p171
      %p178 = scmp.eq.s32.totalorder %s23, 3
      %p179 = por %p177, %p178
      %p180 = scmp.ne.s32.totalorder %s172, %s175
      %p181 = scmp.eq.s32.totalorder %s23, 0
      %p182 = por %p180, %p181
      %p183 = scmp.ne.s32.totalorder %s172, %s175
      %p184 = scmp.eq.s32.totalorder %s28, 3
      %p185 = por %p183, %p184
      %p186 = scmp.ne.s32.totalorder %s175, %s176
      %p187 = scmp.eq.s32.totalorder %s28, 0
      %p188 = por %p186, %p187
      %p189 = scmp.ne.s32.totalorder %s175, %s176
      %p190 = scmp.eq.s32.totalorder %s29, 3
      %p191 = por %p189, %p190
      %p193 = scmp.ne.s32.totalorder %s176, %s192
      %p194 = scmp.eq.s32.totalorder %s29, 0
      %p195 = por %p193, %p194
      %s196 = ssub.s32 %s30, %s42
      %p197 = scmp.eq.s32.totalorder %s196, 0
      %s199 = sadd.s32 %s198, 1
      %s200 = scalar_select %p197, %s198, %s199
      %p203 = pneg %p197
      %p204 = scmp.eq.s32.totalorder %s23, 3
      %p205 = por %p203, %p204
      %p206 = scmp.ne.s32.totalorder %s198, %s201
      %p207 = scmp.eq.s32.totalorder %s23, 0
      %p208 = por %p206, %p207
      %p209 = scmp.ne.s32.totalorder %s198, %s201
      %p210 = scmp.eq.s32.totalorder %s28, 3
      %p211 = por %p209, %p210
      %p212 = scmp.ne.s32.totalorder %s201, %s202
      %p213 = scmp.eq.s32.totalorder %s28, 0
      %p214 = por %p212, %p213
      %p215 = scmp.ne.s32.totalorder %s201, %s202
      %p216 = scmp.eq.s32.totalorder %s29, 3
      %p217 = por %p215, %p216
      %p219 = scmp.ne.s32.totalorder %s202, %s218
      %p220 = scmp.eq.s32.totalorder %s29, 0
      %p221 = por %p219, %p220
      %s222 = ssub.s32 %s30, %s42
      %p223 = scmp.eq.s32.totalorder %s222, 0
      %s225 = sadd.s32 %s224, 1
      %s226 = scalar_select %p223, %s224, %s225
      %p229 = pneg %p223
      %p230 = scmp.eq.s32.totalorder %s23, 3
      %p231 = por %p229, %p230
      %p232 = scmp.ne.s32.totalorder %s224, %s227
      %p233 = scmp.eq.s32.totalorder %s23, 0
      %p234 = por %p232, %p233
      %p235 = scmp.ne.s32.totalorder %s224, %s227
      %p236 = scmp.eq.s32.totalorder %s28, 3
      %p237 = por %p235, %p236
      %p238 = scmp.ne.s32.totalorder %s227, %s228
      %p239 = scmp.eq.s32.totalorder %s28, 0
      %p240 = por %p238, %p239
      %p241 = scmp.ne.s32.totalorder %s227, %s228
      %p242 = scmp.eq.s32.totalorder %s29, 3
      %p243 = por %p241, %p242
      %p245 = scmp.ne.s32.totalorder %s228, %s244
      %p246 = scmp.eq.s32.totalorder %s29, 0
      %p247 = por %p245, %p246
      %s248 = ssub.s32 %s30, %s42
      %s249 = ssub.s32 %s31, %s38
      %s250 = sor.u32 %s248, %s249
      %p251 = scmp.eq.s32.totalorder %s250, 0
      %s253 = sadd.s32 %s252, 1
      %s254 = scalar_select %p251, %s252, %s253
      %p257 = pneg %p251
      %p258 = scmp.eq.s32.totalorder %s23, 3
      %p259 = por %p257, %p258
      %p260 = scmp.ne.s32.totalorder %s252, %s255
      %p261 = scmp.eq.s32.totalorder %s23, 0
      %p262 = por %p260, %p261
      %p263 = scmp.ne.s32.totalorder %s252, %s255
      %p264 = scmp.eq.s32.totalorder %s28, 3
      %p265 = por %p263, %p264
      %p266 = scmp.ne.s32.totalorder %s255, %s256
      %p267 = scmp.eq.s32.totalorder %s28, 0
      %p268 = por %p266, %p267
      %p269 = scmp.ne.s32.totalorder %s255, %s256
      %p270 = scmp.eq.s32.totalorder %s29, 3
      %p271 = por %p269, %p270
      %p273 = scmp.ne.s32.totalorder %s256, %s272
      %p274 = scmp.eq.s32.totalorder %s29, 0
      %p275 = por %p273, %p274
      %p276 = scmp.le.s32.totalorder 1, %s23
      %p277 = scmp.lt.s32.totalorder %s23, 5
      %p278 = pnand %p276, %p277
      %p279 = pneg %p278
      // Predicated region
      $region9: #{tpu_custom_call.1} parent=5 // pred_check
        _
      $region10: #{tpu_custom_call.1} parent=5 // pred_check_branch
        %281 = sbr.rel (%p278) target = $region12
      $region11: #{tpu_custom_call.1} parent=5 // pred_region
        %s282 = ssub.s32 %s23, 1
        // Predicated region
        $region13: #{tpu_custom_call.1} parent=11 // pred_check
          %p283 = pneg %p84
        $region14: #{tpu_custom_call.1} parent=11 // pred_check_branch
          %285 = sbr.rel (%p283) target = $region16
        $region15: #{tpu_custom_call.1} parent=11 // pred_region
          _
        $region16: #{tpu_custom_call.1} parent=11 // pred_fallthru
          _
      $region12: #{tpu_custom_call.1} parent=5 // pred_fallthru
        _
      %p286 = scmp.lt.s32.totalorder %s23, 4
      // Predicated region
      $region17: #{tpu_custom_call.1} parent=5 // pred_check
        %p287 = pneg %p286
      $region18: #{tpu_custom_call.1} parent=5 // pred_check_branch
        %289 = sbr.rel (%p287) target = $region20
      $region19: #{tpu_custom_call.1} parent=5 // pred_region
        // Predicated region
        $region21: #{tpu_custom_call.1} parent=19 // pred_check
          %p290 = pneg %p57
        $region22: #{tpu_custom_call.1} parent=19 // pred_check_branch
          %292 = sbr.rel (%p290) target = $region24
        $region23: #{tpu_custom_call.1} parent=19 // pred_region
          %s293 = sand.u32 %s47, 1
          %s294 = sand.u32 %s47, 1
          %s295 = smul.addr %s294, 32
          %s296 = scalar_lea.vmem [#allocation2], %s295
          %s297 = smul.u32 2, %s31
          %s298 = smul.addr %s30, 8
          %s299 = sadd.s32 %s297, %s298
          %s300 = smul.addr %s299, 8
          %s301 = scalar_lea.vmem %s0, %s300
          // Predicated region
          $region25: #{tpu_custom_call.1} parent=23 // pred_check
            _
          $region26: #{tpu_custom_call.1} parent=23 // pred_check_branch
            %303 = sbr.rel (0) target = $region28
          $region27: #{tpu_custom_call.1} parent=23 // pred_region
            // Predicated region
            $region29: #{tpu_custom_call.1} parent=27 // pred_check
              _
            $region30: #{tpu_custom_call.1} parent=27 // pred_check_branch
              %305 = sbr.rel (0) target = $region32
            $region31: #{tpu_custom_call.1} parent=27 // pred_region
              loop: start=0, step=1, limit=1
              $region33: #{tpu_custom_call.1} parent=31 // loop_pre_header
                _
              $region34: #{tpu_custom_call.1} parent=31 // loop_header
                %s307 = sphi 0, %s311
                %p308 = scmp.ge.s32.totalorder %s307, 1
                %s312 = sphi %s301, %s301
                %s313 = sphi %s296, %s296
              $region35: #{tpu_custom_call.1} parent=31 // loop_header_branch
                %310 = sbr.rel (%p308) target = $region39
              $region36: #{tpu_custom_call.1} parent=31 // loop_body
                %v314 = vld [vmem:[%s312] sm:$0xff]
                %315 = vst [vmem:[%s313] sm:$0xff] %v314
                %v316 = vld [vmem:[%s312 + $0x8] sm:$0xff]
                %317 = vst [vmem:[%s313 + $0x8] sm:$0xff] %v316
                %v318 = vld [vmem:[%s312 + $0x20] sm:$0xff]
                %319 = vst [vmem:[%s313 + $0x10] sm:$0xff] %v318
                %v320 = vld [vmem:[%s312 + $0x28] sm:$0xff]
                %321 = vst [vmem:[%s313 + $0x18] sm:$0xff] %v320
              $region37: #{tpu_custom_call.1} parent=31 // loop_footer
                %s311 = sadd.s32 1, %s307
              $region38: #{tpu_custom_call.1} parent=31 // loop_footer_branch
                %306 = sbr.rel target = $region34
              $region39: #{tpu_custom_call.1} parent=31 // loop_exit
                _
            $region32: #{tpu_custom_call.1} parent=27 // pred_fallthru
              _
            // Predicated region
            $region40: #{tpu_custom_call.1} parent=27 // pred_check
              _
            $region41: #{tpu_custom_call.1} parent=27 // pred_check_branch
              %323 = sbr.rel target = $region43
            $region42: #{tpu_custom_call.1} parent=27 // pred_region
              _
            $region43: #{tpu_custom_call.1} parent=27 // pred_fallthru
              _
          $region28: #{tpu_custom_call.1} parent=23 // pred_fallthru
            _
          %324 = vnop
        $region24: #{tpu_custom_call.1} parent=19 // pred_fallthru
          _
        // Predicated region
        $region44: #{tpu_custom_call.1} parent=19 // pred_check
          %p325 = pneg %p104
        $region45: #{tpu_custom_call.1} parent=19 // pred_check_branch
          %327 = sbr.rel (%p325) target = $region47
        $region46: #{tpu_custom_call.1} parent=19 // pred_region
          %p328 = scmp.lt.s32.totalorder %s30, 1
          %s329 = scalar_select %p328, %s30, 1
          %s330 = smul.addr %s329, 8
          %s331 = scalar_lea.vmem %s2, %s330
        $region47: #{tpu_custom_call.1} parent=19 // pred_fallthru
          _
        // Predicated region
        $region48: #{tpu_custom_call.1} parent=19 // pred_check
          %p332 = pneg %p130
        $region49: #{tpu_custom_call.1} parent=19 // pred_check_branch
          %334 = sbr.rel (%p332) target = $region51
        $region50: #{tpu_custom_call.1} parent=19 // pred_region
          %p335 = scmp.lt.s32.totalorder %s30, 1
          %s336 = scalar_select %p335, %s30, 1
          %s337 = smul.addr %s336, 8
          %s338 = scalar_lea.vmem %s3, %s337
        $region51: #{tpu_custom_call.1} parent=19 // pred_fallthru
          _
        // Predicated region
        $region52: #{tpu_custom_call.1} parent=19 // pred_check
          %p339 = pneg %p156
        $region53: #{tpu_custom_call.1} parent=19 // pred_check_branch
          %341 = sbr.rel (%p339) target = $region55
        $region54: #{tpu_custom_call.1} parent=19 // pred_region
          %s342 = sand.u32 %s146, 1
          %s343 = scalar_lea.sflag [#allocation4], %s342
          %s344 = sand.u32 %s146, 1
          %s345 = smul.addr %s344, 32
          %s346 = scalar_lea.vmem [#allocation3], %s345
          %348 = vsyncadd %s343, 0
          %s349 = smul.addr %s30, 4
          %s350 = smul.addr %s349, 8
          %s351 = scalar_lea.hbm %s4, %s350
          %s352 = sshll.u32 %s351, 4
          %s353 = int_to_ptr.hbm [resolvable:$true] %s352
          %s354 = sshll.u32 %s346, 4
          %s355 = int_to_ptr.vmem [resolvable:$true] %s354
          %360 = dma.hbm_to_vmem [thread:$0]  %s353, 512, %s355, %s343, 128, 128, 8
        $region55: #{tpu_custom_call.1} parent=19 // pred_fallthru
          _
        // Predicated region
        $region56: #{tpu_custom_call.1} parent=19 // pred_check
          %p361 = pneg %p182
        $region57: #{tpu_custom_call.1} parent=19 // pred_check_branch
          %363 = sbr.rel (%p361) target = $region59
        $region58: #{tpu_custom_call.1} parent=19 // pred_region
          %p364 = scmp.lt.s32.totalorder %s30, 1
          %s365 = scalar_select %p364, %s30, 1
          %s366 = smul.addr %s365, 4
          %s367 = smul.addr %s366, 8
          %s368 = scalar_lea.vmem %s5, %s367
        $region59: #{tpu_custom_call.1} parent=19 // pred_fallthru
          _
        // Predicated region
        $region60: #{tpu_custom_call.1} parent=19 // pred_check
          %p369 = pneg %p208
        $region61: #{tpu_custom_call.1} parent=19 // pred_check_branch
          %371 = sbr.rel (%p369) target = $region63
        $region62: #{tpu_custom_call.1} parent=19 // pred_region
          %s372 = sand.u32 %s198, 1
          %s373 = scalar_lea.sflag [#allocation7], %s372
          %s374 = sand.u32 %s198, 1
          %s375 = smul.addr %s374, 32
          %s376 = scalar_lea.vmem [#allocation6], %s375
          %378 = vsyncadd %s373, 0
          %s379 = smul.addr %s30, 4
          %s380 = smul.addr %s379, 8
          %s381 = scalar_lea.hbm %s6, %s380
          %s382 = sshll.u32 %s381, 4
          %s383 = int_to_ptr.hbm [resolvable:$true] %s382
          %s384 = sshll.u32 %s376, 4
          %s385 = int_to_ptr.vmem [resolvable:$true] %s384
          %390 = dma.hbm_to_vmem [thread:$0]  %s383, 512, %s385, %s373, 128, 128, 8
        $region63: #{tpu_custom_call.1} parent=19 // pred_fallthru
          _
        // Predicated region
        $region64: #{tpu_custom_call.1} parent=19 // pred_check
          %p391 = pneg %p234
        $region65: #{tpu_custom_call.1} parent=19 // pred_check_branch
          %393 = sbr.rel (%p391) target = $region67
        $region66: #{tpu_custom_call.1} parent=19 // pred_region
          %p394 = scmp.lt.s32.totalorder %s30, 1
          %s395 = scalar_select %p394, %s30, 1
          %s396 = smul.addr %s395, 4
          %s397 = smul.addr %s396, 8
          %s398 = scalar_lea.vmem %s7, %s397
        $region67: #{tpu_custom_call.1} parent=19 // pred_fallthru
          _
      $region20: #{tpu_custom_call.1} parent=5 // pred_fallthru
        _
      %p399 = scmp.le.s32.totalorder 1, %s23
      %p400 = scmp.lt.s32.totalorder %s23, 5
      %p401 = pnand %p399, %p400
      %p402 = pneg %p401
      // Predicated region
      $region68: #{tpu_custom_call.1} parent=5 // pred_check
        _
      $region69: #{tpu_custom_call.1} parent=5 // pred_check_branch
        %404 = sbr.rel (%p401) target = $region71
      $region70: #{tpu_custom_call.1} parent=5 // pred_region
        %s405 = ssub.s32 %s23, 1
        %s406 = sand.u32 %s50, 1
        %s407 = sand.u32 %s50, 1
        %s408 = smul.addr %s407, 32
        %s409 = scalar_lea.vmem [#allocation2], %s408
        // Predicated region
        $region72: #{tpu_custom_call.1} parent=70 // pred_check
          %p410 = pneg %p63
        $region73: #{tpu_custom_call.1} parent=70 // pred_check_branch
          %412 = sbr.rel (%p410) target = $region75
        $region74: #{tpu_custom_call.1} parent=70 // pred_region
          _
        $region75: #{tpu_custom_call.1} parent=70 // pred_fallthru
          _
        %s413 = sand.u32 %s149, 1
        %s414 = scalar_lea.sflag [#allocation4], %s413
        %s415 = sand.u32 %s149, 1
        %s416 = smul.addr %s415, 32
        %s417 = scalar_lea.vmem [#allocation3], %s416
        // Predicated region
        $region76: #{tpu_custom_call.1} parent=70 // pred_check
          %p418 = pneg %p162
        $region77: #{tpu_custom_call.1} parent=70 // pred_check_branch
          %420 = sbr.rel (%p418) target = $region79
        $region78: #{tpu_custom_call.1} parent=70 // pred_region
          %422 = dma.done %s414, 512
        $region79: #{tpu_custom_call.1} parent=70 // pred_fallthru
          _
        %s423 = sand.u32 %s201, 1
        %s424 = scalar_lea.sflag [#allocation7], %s423
        %s425 = sand.u32 %s201, 1
        %s426 = smul.addr %s425, 32
        %s427 = scalar_lea.vmem [#allocation6], %s426
        // Predicated region
        $region80: #{tpu_custom_call.1} parent=70 // pred_check
          %p428 = pneg %p214
        $region81: #{tpu_custom_call.1} parent=70 // pred_check_branch
          %430 = sbr.rel (%p428) target = $region83
        $region82: #{tpu_custom_call.1} parent=70 // pred_region
          %432 = dma.done %s424, 512
        $region83: #{tpu_custom_call.1} parent=70 // pred_fallthru
          _
        %s433 = sand.u32 %s50, 1
        %s434 = sand.u32 %s50, 1
        %s435 = smul.addr %s434, 32
        %s436 = scalar_lea.vmem [#allocation2], %s435
        %p437 = pneg %p63
        %p438 = pneg %p60
        %p439 = pneg %p84
        %p440 = pneg %p81
        %p441 = scmp.lt.s32.totalorder %s32, 1
        %s442 = scalar_select %p441, %s32, 1
        %s443 = smul.addr %s442, 8
        %s444 = scalar_lea.vmem %s2, %s443
        %p445 = pneg %p110
        %p446 = pneg %p107
        %p447 = scmp.lt.s32.totalorder %s32, 1
        %s448 = scalar_select %p447, %s32, 1
        %s449 = smul.addr %s448, 8
        %s450 = scalar_lea.vmem %s3, %s449
        %p451 = pneg %p136
        %p452 = pneg %p133
        %s453 = sand.u32 %s149, 1
        %s454 = scalar_lea.sflag [#allocation4], %s453
        %s455 = sand.u32 %s149, 1
        %s456 = smul.addr %s455, 32
        %s457 = scalar_lea.vmem [#allocation3], %s456
        %p458 = pneg %p162
        %p459 = pneg %p159
        %p460 = scmp.lt.s32.totalorder %s32, 1
        %s461 = scalar_select %p460, %s32, 1
        %s462 = smul.addr %s461, 4
        %s463 = smul.addr %s462, 8
        %s464 = scalar_lea.vmem %s5, %s463
        %p465 = pneg %p188
        %p466 = pneg %p185
        %s467 = sand.u32 %s201, 1
        %s468 = scalar_lea.sflag [#allocation7], %s467
        %s469 = sand.u32 %s201, 1
        %s470 = smul.addr %s469, 32
        %s471 = scalar_lea.vmem [#allocation6], %s470
        %p472 = pneg %p214
        %p473 = pneg %p211
        %p474 = scmp.lt.s32.totalorder %s32, 1
        %s475 = scalar_select %p474, %s32, 1
        %s476 = smul.addr %s475, 4
        %s477 = smul.addr %s476, 8
        %s478 = scalar_lea.vmem %s7, %s477
        %p479 = pneg %p240
        %p480 = pneg %p237
        %p481 = pneg %p268
        %p482 = pneg %p265
        %s483 = sand.u32 %s255, 1
        %s484 = scalar_lea.sflag [#allocation5], %s483
        %s485 = sand.u32 %s255, 1
        %s486 = smul.addr %s485, 64
        %s487 = scalar_lea.vmem [#allocation8], %s486
        %s488 = smul.u32 2, %s33
        %p489 = scmp.lt.s32.totalorder %s32, 1
        %s490 = scalar_select %p489, %s32, 1
        %s491 = smul.addr %s490, 8
        %s492 = scalar_lea.vmem %s2, %s491
        %p493 = scmp.lt.s32.totalorder %s32, 1
        %s494 = scalar_select %p493, %s32, 1
        %s495 = smul.addr %s494, 8
        %s496 = scalar_lea.vmem %s3, %s495
        %p497 = scmp.lt.s32.totalorder %s32, 1
        %s498 = scalar_select %p497, %s32, 1
        %s499 = smul.addr %s498, 4
        %s500 = smul.addr %s499, 8
        %s501 = scalar_lea.vmem %s5, %s500
        %p502 = scmp.lt.s32.totalorder %s32, 1
        %s503 = scalar_select %p502, %s32, 1
        %s504 = smul.addr %s503, 4
        %s505 = smul.addr %s504, 8
        %s506 = scalar_lea.vmem %s7, %s505
        %s507 = smul.u32 2, %s33
        %v508 = vld [vmem:[%s1] ss:$2 sm:$0x3]
        %s509 = scalar_lea.vmem %s1, 1
        %v510 = vld [vmem:[%s509] ss:$2 sm:$0x3]
        %v511 = vld [vmem:[%s492] sm:$0xff]
        %v512 = vld [vmem:[%s409] sm:$0xff]
        %v513 = vld [vmem:[%s409 + $0x8] sm:$0xff]
        %v514 = vld [vmem:[%s409 + $0x10] sm:$0xff]
        %v515 = vld [vmem:[%s409 + $0x18] sm:$0xff]
        %v516 = vld [vmem:[%s496] sm:$0xff]
        %518 = vset.pattern.permute.xlu0 0
        %519 = vperm.xlu0 %518, %v516
        %v520 = vpop.permute.xlu0 %519
        %vm522 = vcmask 130048
        %v524 = vsel %vm522, %v511, 0
        %526 = vmatpush.msra.mxu0 0.0
        %527 = vmatpush.msra.mxu0 0.0
        %528 = vmatpush.msra.mxu0 0.0
        %529 = vmatpush.msra.mxu0 0.0
        %530 = vmatpush.msra.mxu0 0.0
        %531 = vmatpush.msra.mxu0 0.0
        %532 = vmatpush.msra.mxu0 0.0
        %533 = vmatpush.msra.mxu0 0.0
        %534 = vmatpush.msra.mxu0 0.0
        %535 = vmatpush.msra.mxu0 0.0
        %536 = vmatpush.msra.mxu0 0.0
        %537 = vmatpush.msra.mxu0 0.0
        %538 = vmatpush.msra.mxu0 0.0
        %539 = vmatpush.msra.mxu0 0.0
        %540 = vmatpush.msra.mxu0 %v514
        %541 = vmatpush.msra.mxu0 %v512
        %542 = vmatmul.f32.gmra.mxu0 %v524
        %v543 = vpop.f32.mrf.mxu0
        %v544 = vadd.f32 %v520, %v543
        %545 = vdwg.mxu0
        %546 = vmatpush.msra.mxu0 0.0
        %547 = vmatpush.msra.mxu0 0.0
        %548 = vmatpush.msra.mxu0 0.0
        %549 = vmatpush.msra.mxu0 0.0
        %550 = vmatpush.msra.mxu0 0.0
        %551 = vmatpush.msra.mxu0 0.0
        %552 = vmatpush.msra.mxu0 0.0
        %553 = vmatpush.msra.mxu0 0.0
        %554 = vmatpush.msra.mxu0 0.0
        %555 = vmatpush.msra.mxu0 0.0
        %556 = vmatpush.msra.mxu0 0.0
        %557 = vmatpush.msra.mxu0 0.0
        %558 = vmatpush.msra.mxu0 0.0
        %559 = vmatpush.msra.mxu0 0.0
        %560 = vmatpush.msra.mxu0 %v515
        %561 = vmatpush.msra.mxu0 %v513
        %562 = vmatmul.f32.gmra.mxu0 %v524
        %v563 = vpop.f32.mrf.mxu0
        %v564 = vadd.f32 %v520, %v563
        %565 = vdwg.mxu0
        %v566 = vmax.f32 %v544, 0.0
        %v567 = vmax.f32 %v564, 0.0
        %568 = vrot.lane.b32.xlu0 %v566, 127
        %v569 = vpop.permute.xlu0 %568
        %570 = vrot.lane.b32.xlu0 %v567, 127
        %v571 = vpop.permute.xlu0 %570
        %v572 = vlaneseq
        %v573 = vand.u32 %v572, 127
        %vm574 = vcmp.lt.s32.totalorder %v573, 127
        %v575 = vsel %vm574, %v569, %v571
        %v576 = vsel %vm574, %v571, %v569
        %v578 = vperm.slane %v508, 0
        %v579 = vperm.slane %v508, 1
        %v582 = vmul.f32 %v575, %v578
        %v583 = vmul.f32 %v576, %v579
        %584 = vrot.lane.b32.xlu0 %v566, 112
        %v585 = vpop.permute.xlu0 %584
        %586 = vrot.lane.b32.xlu0 %v567, 112
        %v587 = vpop.permute.xlu0 %586
        %vm588 = vcmp.lt.s32.totalorder %v573, 112
        %v589 = vsel %vm588, %v585, %v587
        %v590 = vsel %vm588, %v587, %v585
        %v592 = vperm.slane %v510, 0
        %v593 = vperm.slane %v510, 1
        %v596 = vmul.f32 %v589, %v592
        %v597 = vmul.f32 %v590, %v593
        %598 = vrot.lane.b32.xlu0 %v582, 112
        %v599 = vpop.permute.xlu0 %598
        %600 = vrot.lane.b32.xlu0 %v583, 112
        %v601 = vpop.permute.xlu0 %600
        %v602 = vsel %vm588, %v599, %v601
        %v603 = vsel %vm588, %v601, %v599
        %v604 = vmul.f32 %v602, %v592
        %v605 = vmul.f32 %v603, %v593
        %v606 = vld [vmem:[%s417] sm:$0xff]
        %v607 = vld [vmem:[%s417 + $0x8] sm:$0xff]
        %v608 = vld [vmem:[%s417 + $0x10] sm:$0xff]
        %v609 = vld [vmem:[%s417 + $0x18] sm:$0xff]
        %v610 = vld [vmem:[%s501] sm:$0xff]
        %v611 = vld [vmem:[%s501 + $0x8] sm:$0xff]
        %v612 = vld [vmem:[%s501 + $0x10] sm:$0xff]
        %v613 = vld [vmem:[%s501 + $0x18] sm:$0xff]
        %615 = vset.pattern.permute.xlu0 0
        %616 = vperm.xlu0 %615, %v610
        %v617 = vpop.permute.xlu0 %616
        %620 = vset.pattern.permute.xlu0 0
        %621 = vperm.xlu0 %620, %v611
        %v622 = vpop.permute.xlu0 %621
        %625 = vset.pattern.permute.xlu0 0
        %626 = vperm.xlu0 %625, %v612
        %v627 = vpop.permute.xlu0 %626
        %630 = vset.pattern.permute.xlu0 0
        %631 = vperm.xlu0 %630, %v613
        %v632 = vpop.permute.xlu0 %631
        %vm634 = vcmask 261120
        %v636 = vsel %vm634, %v606, 0
        %v639 = vsel %vm634, %v607, 0
        %v642 = vsel %vm634, %v608, 0
        %v645 = vsel %vm634, %v609, 0
        %647 = vmatpush.msra.mxu0 0.0
        %648 = vmatpush.msra.mxu0 0.0
        %649 = vmatpush.msra.mxu0 0.0
        %650 = vmatpush.msra.mxu0 0.0
        %651 = vmatpush.msra.mxu0 0.0
        %652 = vmatpush.msra.mxu0 0.0
        %653 = vmatpush.msra.mxu0 0.0
        %654 = vmatpush.msra.mxu0 0.0
        %655 = vmatpush.msra.mxu0 0.0
        %656 = vmatpush.msra.mxu0 0.0
        %657 = vmatpush.msra.mxu0 0.0
        %658 = vmatpush.msra.mxu0 0.0
        %659 = vmatpush.msra.mxu0 %v604
        %660 = vmatpush.msra.mxu0 %v596
        %661 = vmatpush.msra.mxu0 %v582
        %662 = vmatpush.msra.mxu0 %v566
        %663 = vmatmul.f32.gmra.mxu0 %v636
        %v664 = vpop.f32.mrf.mxu0
        %v665 = vadd.f32 %v617, %v664
        %666 = vmatmul.f32.gmra.mxu0 %v639
        %v667 = vpop.f32.mrf.mxu0
        %v668 = vadd.f32 %v622, %v667
        %669 = vmatmul.f32.gmra.mxu0 %v642
        %v670 = vpop.f32.mrf.mxu0
        %v671 = vadd.f32 %v627, %v670
        %672 = vmatmul.f32.gmra.mxu0 %v645
        %v673 = vpop.f32.mrf.mxu0
        %v674 = vadd.f32 %v632, %v673
        %675 = vdwg.mxu0
        %676 = vmatpush.msra.mxu0 0.0
        %677 = vmatpush.msra.mxu0 0.0
        %678 = vmatpush.msra.mxu0 0.0
        %679 = vmatpush.msra.mxu0 0.0
        %680 = vmatpush.msra.mxu0 0.0
        %681 = vmatpush.msra.mxu0 0.0
        %682 = vmatpush.msra.mxu0 0.0
        %683 = vmatpush.msra.mxu0 0.0
        %684 = vmatpush.msra.mxu0 0.0
        %685 = vmatpush.msra.mxu0 0.0
        %686 = vmatpush.msra.mxu0 0.0
        %687 = vmatpush.msra.mxu0 0.0
        %688 = vmatpush.msra.mxu0 %v605
        %689 = vmatpush.msra.mxu0 %v597
        %690 = vmatpush.msra.mxu0 %v583
        %691 = vmatpush.msra.mxu0 %v567
        %692 = vmatmul.f32.gmra.mxu0 %v636
        %v693 = vpop.f32.mrf.mxu0
        %v694 = vadd.f32 %v617, %v693
        %695 = vmatmul.f32.gmra.mxu0 %v639
        %v696 = vpop.f32.mrf.mxu0
        %v697 = vadd.f32 %v622, %v696
        %698 = vmatmul.f32.gmra.mxu0 %v642
        %v699 = vpop.f32.mrf.mxu0
        %v700 = vadd.f32 %v627, %v699
        %701 = vmatmul.f32.gmra.mxu0 %v645
        %v702 = vpop.f32.mrf.mxu0
        %v703 = vadd.f32 %v632, %v702
        %704 = vdwg.mxu0
        %v705 = vmax.f32 %v665, 0.0
        %v706 = vmax.f32 %v694, 0.0
        %v707 = vmax.f32 %v668, 0.0
        %v708 = vmax.f32 %v697, 0.0
        %v709 = vmax.f32 %v671, 0.0
        %v710 = vmax.f32 %v700, 0.0
        %v711 = vmax.f32 %v674, 0.0
        %v712 = vmax.f32 %v703, 0.0
        %v713 = vld [vmem:[%s427] sm:$0xff]
        %v714 = vld [vmem:[%s427 + $0x8] sm:$0xff]
        %v715 = vld [vmem:[%s427 + $0x10] sm:$0xff]
        %v716 = vld [vmem:[%s427 + $0x18] sm:$0xff]
        %v717 = vld [vmem:[%s506] sm:$0xff]
        %v718 = vld [vmem:[%s506 + $0x8] sm:$0xff]
        %v719 = vld [vmem:[%s506 + $0x10] sm:$0xff]
        %v720 = vld [vmem:[%s506 + $0x18] sm:$0xff]
        %722 = vset.pattern.permute.xlu0 0
        %723 = vperm.xlu0 %722, %v717
        %v724 = vpop.permute.xlu0 %723
        %727 = vset.pattern.permute.xlu0 0
        %728 = vperm.xlu0 %727, %v718
        %v729 = vpop.permute.xlu0 %728
        %732 = vset.pattern.permute.xlu0 0
        %733 = vperm.xlu0 %732, %v719
        %v734 = vpop.permute.xlu0 %733
        %737 = vset.pattern.permute.xlu0 0
        %738 = vperm.xlu0 %737, %v720
        %v739 = vpop.permute.xlu0 %738
        %v742 = vsel %vm634, %v713, 0
        %v745 = vsel %vm634, %v714, 0
        %v748 = vsel %vm634, %v715, 0
        %v751 = vsel %vm634, %v716, 0
        %753 = vmatpush.msra.mxu0 0.0
        %754 = vmatpush.msra.mxu0 0.0
        %755 = vmatpush.msra.mxu0 0.0
        %756 = vmatpush.msra.mxu0 0.0
        %757 = vmatpush.msra.mxu0 0.0
        %758 = vmatpush.msra.mxu0 0.0
        %759 = vmatpush.msra.mxu0 0.0
        %760 = vmatpush.msra.mxu0 0.0
        %761 = vmatpush.msra.mxu0 0.0
        %762 = vmatpush.msra.mxu0 0.0
        %763 = vmatpush.msra.mxu0 0.0
        %764 = vmatpush.msra.mxu0 0.0
        %765 = vmatpush.msra.mxu0 %v711
        %766 = vmatpush.msra.mxu0 %v709
        %767 = vmatpush.msra.mxu0 %v707
        %768 = vmatpush.msra.mxu0 %v705
        %769 = vmatmul.f32.gmra.mxu0 %v742
        %v770 = vpop.f32.mrf.mxu0
        %v771 = vadd.f32 %v724, %v770
        %772 = vmatmul.f32.gmra.mxu0 %v745
        %v773 = vpop.f32.mrf.mxu0
        %v774 = vadd.f32 %v729, %v773
        %775 = vmatmul.f32.gmra.mxu0 %v748
        %v776 = vpop.f32.mrf.mxu0
        %v777 = vadd.f32 %v734, %v776
        %778 = vmatmul.f32.gmra.mxu0 %v751
        %v779 = vpop.f32.mrf.mxu0
        %v780 = vadd.f32 %v739, %v779
        %781 = vdwg.mxu0
        %782 = vmatpush.msra.mxu0 0.0
        %783 = vmatpush.msra.mxu0 0.0
        %784 = vmatpush.msra.mxu0 0.0
        %785 = vmatpush.msra.mxu0 0.0
        %786 = vmatpush.msra.mxu0 0.0
        %787 = vmatpush.msra.mxu0 0.0
        %788 = vmatpush.msra.mxu0 0.0
        %789 = vmatpush.msra.mxu0 0.0
        %790 = vmatpush.msra.mxu0 0.0
        %791 = vmatpush.msra.mxu0 0.0
        %792 = vmatpush.msra.mxu0 0.0
        %793 = vmatpush.msra.mxu0 0.0
        %794 = vmatpush.msra.mxu0 %v712
        %795 = vmatpush.msra.mxu0 %v710
        %796 = vmatpush.msra.mxu0 %v708
        %797 = vmatpush.msra.mxu0 %v706
        %798 = vmatmul.f32.gmra.mxu0 %v742
        %v799 = vpop.f32.mrf.mxu0
        %v800 = vadd.f32 %v724, %v799
        %801 = vmatmul.f32.gmra.mxu0 %v745
        %v802 = vpop.f32.mrf.mxu0
        %v803 = vadd.f32 %v729, %v802
        %804 = vmatmul.f32.gmra.mxu0 %v748
        %v805 = vpop.f32.mrf.mxu0
        %v806 = vadd.f32 %v734, %v805
        %807 = vmatmul.f32.gmra.mxu0 %v751
        %v808 = vpop.f32.mrf.mxu0
        %v809 = vadd.f32 %v739, %v808
        %810 = vdwg.mxu0
        %v811 = vmax.f32 %v771, 0.0
        %v812 = vmax.f32 %v800, 0.0
        %v813 = vmax.f32 %v774, 0.0
        %v814 = vmax.f32 %v803, 0.0
        %v815 = vmax.f32 %v777, 0.0
        %v816 = vmax.f32 %v806, 0.0
        %v817 = vmax.f32 %v780, 0.0
        %v818 = vmax.f32 %v809, 0.0
        %819 = vst [vmem:[%s487] sm:$0xff] %v811
        %820 = vst [vmem:[%s487 + $0x8] sm:$0xff] %v812
        %821 = vst [vmem:[%s487 + $0x10] sm:$0xff] %v813
        %822 = vst [vmem:[%s487 + $0x18] sm:$0xff] %v814
        %823 = vst [vmem:[%s487 + $0x20] sm:$0xff] %v815
        %824 = vst [vmem:[%s487 + $0x28] sm:$0xff] %v816
        %825 = vst [vmem:[%s487 + $0x30] sm:$0xff] %v817
        %826 = vst [vmem:[%s487 + $0x38] sm:$0xff] %v818
        %s827 = sand.u32 %s255, 1
        %s828 = scalar_lea.sflag [#allocation5], %s827
        %s829 = sand.u32 %s255, 1
        %s830 = smul.addr %s829, 64
        %s831 = scalar_lea.vmem [#allocation8], %s830
        // Predicated region
        $region84: #{tpu_custom_call.1} parent=70 // pred_check
          %p832 = pneg %p265
        $region85: #{tpu_custom_call.1} parent=70 // pred_check_branch
          %834 = sbr.rel (%p832) target = $region87
        $region86: #{tpu_custom_call.1} parent=70 // pred_region
          %s835 = smul.u32 2, %s33
          %837 = vsyncadd %s828, 0
          %s838 = smul.addr %s32, 16
          %s839 = sadd.s32 %s835, %s838
          %s840 = smul.addr %s839, 8
          %s841 = scalar_lea.hbm %s8, %s840
          %s842 = sshll.u32 %s831, 4
          %s843 = int_to_ptr.vmem [resolvable:$true] %s842
          %s844 = sshll.u32 %s841, 4
          %s845 = int_to_ptr.hbm [resolvable:$true] %s844
          %850 = dma.vmem_to_hbm [thread:$0]  %s843, 1024, %s845, %s828, 256, 512, 16
        $region87: #{tpu_custom_call.1} parent=70 // pred_fallthru
          _
      $region71: #{tpu_custom_call.1} parent=5 // pred_fallthru
        _
      %p851 = scmp.le.s32.totalorder 2, %s23
      // Predicated region
      $region88: #{tpu_custom_call.1} parent=5 // pred_check
        %p852 = pneg %p851
      $region89: #{tpu_custom_call.1} parent=5 // pred_check_branch
        %854 = sbr.rel (%p852) target = $region91
      $region90: #{tpu_custom_call.1} parent=5 // pred_region
        %s855 = ssub.s32 %s23, 2
        // Predicated region
        $region92: #{tpu_custom_call.1} parent=90 // pred_check
          %p856 = pneg %p271
        $region93: #{tpu_custom_call.1} parent=90 // pred_check_branch
          %858 = sbr.rel (%p856) target = $region95
        $region94: #{tpu_custom_call.1} parent=90 // pred_region
          %s859 = sand.u32 %s256, 1
          %s860 = scalar_lea.sflag [#allocation5], %s859
          %s861 = sand.u32 %s256, 1
          %s862 = smul.addr %s861, 64
          %s863 = scalar_lea.vmem [#allocation8], %s862
          %865 = dma.done %s860, 1024
        $region95: #{tpu_custom_call.1} parent=90 // pred_fallthru
          _
      $region91: #{tpu_custom_call.1} parent=5 // pred_fallthru
        _
    $region6: #{tpu_custom_call.1} parent=1 // loop_footer
      %s27 = sadd.s32 1, %s23
    $region7: #{tpu_custom_call.1} parent=1 // loop_footer_branch
      %22 = sbr.rel target = $region3
    $region8: #{tpu_custom_call.1} parent=1 // loop_exit
      _
    %866 = vsyncpa [#allocation4], 1
    %s867 = scalar_lea.sflag [#allocation4], 1
    %868 = vsyncpa %s867, 1
    %869 = vsyncpa [#allocation7], 1
    %s870 = scalar_lea.sflag [#allocation7], 1
    %871 = vsyncpa %s870, 1
    %872 = vsyncpa [#allocation5], 1
    %s873 = scalar_lea.sflag [#allocation5], 1
    %874 = vsyncpa %s873, 1

</llo_original>
